<compile_context>
chip_gen: v7x
topology: tpu7x:2x2x1
jax: 0.10.0
libtpu: 0.0.40
codegen_flags: <defaults>
</compile_context>

<pallas_src>
import functools
import math

import jax
import jax.numpy as jnp
from jax.experimental import pallas as pl
from jax.experimental.pallas import tpu as pltpu


def _fused_mlp_kernel(*refs, n_layers: int):
    """Fused MLP kernel.

    refs = (x_ref, w0, b0, w1, b1, ..., w_{L-1}, b_{L-1}, o_ref)

    Matmuls hit the MXU with f32 accumulation, bias add on the VPU, tanh on
    the EUP.  Intermediate activations (sub-128 lane widths) live only in
    vregs, so there are no lane-sparse intermediate stores.
    """
    x_ref = refs[0]
    o_ref = refs[-1]
    param_refs = refs[1:-1]

    h = x_ref[...].astype(jnp.float32)
    for idx in range(n_layers):
        w = param_refs[2 * idx][...].astype(jnp.float32)          # (K, N)
        b = param_refs[2 * idx + 1][...].astype(jnp.float32)      # (1, N)
        h = jnp.dot(h, w, preferred_element_type=jnp.float32) + b
        if idx < n_layers - 1:
            h = jnp.tanh(h)
    o_ref[...] = h.astype(o_ref.dtype)


def dnn_forward(params, x, *, tm_cap=512):
    """Forward pass of the whole MLP as ONE Pallas call.

    params: list of (w, b) with w shaped (in_features, out_features).
    x:      (batch, in_features) activations.
    tm_cap: max rows per block when tiling over the batch.  512 keeps the
            double-buffered x tile + output tile well inside the 32 MiB scoped
            VMEM budget on every generation (incl. v7x's 64 MiB physical).
    """
    n_layers = len(params)
    M, K0 = x.shape
    n_out = params[-1][0].shape[1]

    # Pad batch to a sublane multiple (8), then to a multiple of the tile.
    m_pad = max(8, ((M + 7) // 8) * 8)
    tm = min(m_pad, tm_cap)
    m_pad = ((m_pad + tm - 1) // tm) * tm
    if m_pad != M:
        x = jnp.pad(x, ((0, m_pad - M), (0, 0)))

    # Flatten params; biases as (1, N) rows so they broadcast over the batch.
    flat = []
    for w, b in params:
        flat.append(w)
        flat.append(b.reshape(1, -1))

    kernel = functools.partial(_fused_mlp_kernel, n_layers=n_layers)
    out_shape = jax.ShapeDtypeStruct((m_pad, n_out), x.dtype)
    n_steps = m_pad // tm

    if n_steps == 1:
        # Single block: no grid, everything (x, all weights, output) resident
        # in VMEM for the one and only kernel invocation.
        vmem_spec = pl.BlockSpec(memory_space=pltpu.MemorySpace.VMEM)
        out = pl.pallas_call(
            kernel,
            out_shape=out_shape,
            in_specs=[vmem_spec] * (1 + len(flat)),
            out_specs=vmem_spec,
        )(x, *flat)
    else:
        # Tile only over M; weights/biases are tiny untiled VMEM blocks reused
        # every grid step.  "parallel" lets v7x's 2 TCs split the batch.
        in_specs = [pl.BlockSpec((tm, K0), lambda i: (i, 0))]
        for arr in flat:
            in_specs.append(pl.BlockSpec(arr.shape, lambda i: (0, 0)))
        out = pl.pallas_call(
            kernel,
            out_shape=out_shape,
            grid=(n_steps,),
            in_specs=in_specs,
            out_specs=pl.BlockSpec((tm, n_out), lambda i: (i, 0)),
            compiler_params=pltpu.CompilerParams(
                dimension_semantics=("parallel",)),
        )(x, *flat)

    return out[:M]


def init_dnn_params(layers, key):
    """Matches the PyTorch init: xavier_normal_(weight, gain=sqrt(2)), bias=0.
    Weights returned as (in_features, out_features)."""
    params = []
    for i in range(len(layers) - 1):
        fan_in, fan_out = layers[i], layers[i + 1]
        key, sub = jax.random.split(key)
        std = math.sqrt(2.0) * math.sqrt(2.0 / (fan_in + fan_out))
        w = std * jax.random.normal(sub, (fan_in, fan_out), dtype=jnp.float32)
        b = jnp.zeros((fan_out,), dtype=jnp.float32)
        params.append((w, b))
    return params


def dnn_forward_reference(params, x):
    """Pure-JAX reference for correctness checking."""
    n = len(params)
    h = x
    for idx, (w, b) in enumerate(params):
        h = h @ w + b
        if idx < n - 1:
            h = jnp.tanh(h)
    return h


if __name__ == "__main__":
    # Small shapes consistent with the module: layers spec + batched input.
    layers = [4, 32, 32, 2]     # input dim 4, two hidden layers of 32, output 2
    batch = 8

    key = jax.random.PRNGKey(0)
    key, xkey = jax.random.split(key)
    x = jax.random.normal(xkey, (batch, layers[0]), dtype=jnp.float32)
    params = init_dnn_params(layers, key)

    # 1) Single-block (gridless) fused path.
    out = jax.block_until_ready(dnn_forward(params, x))
    ref = dnn_forward_reference(params, x)
    assert out.shape == (batch, layers[-1])
    assert jnp.allclose(out, ref, atol=1e-5, rtol=1e-5), "mismatch (fused)"

    # 2) Exercise the M-tiled grid path (still tiny) to validate the tiling.
    key, xkey2 = jax.random.split(key)
    x_big = jax.random.normal(xkey2, (32, layers[0]), dtype=jnp.float32)
    out_big = jax.block_until_ready(dnn_forward(params, x_big, tm_cap=16))
    ref_big = dnn_forward_reference(params, x_big)
    assert out_big.shape == (32, layers[-1])
    assert jnp.allclose(out_big, ref_big, atol=1e-5, rtol=1e-5), "mismatch (tiled)"

    print("KERNEL_OK")
</pallas_src>

<mosaic_0001>
module attributes {stable_mosaic.version = 11 : i64} {
  func.func @_fused_mlp_kernel(%arg0: memref<8x4xf32, #tpu.memory_space<vmem>>, %arg1: memref<4x32xf32, #tpu.memory_space<vmem>>, %arg2: memref<1x32xf32, #tpu.memory_space<vmem>>, %arg3: memref<32x32xf32, #tpu.memory_space<vmem>>, %arg4: memref<1x32xf32, #tpu.memory_space<vmem>>, %arg5: memref<32x2xf32, #tpu.memory_space<vmem>>, %arg6: memref<1x2xf32, #tpu.memory_space<vmem>>, %arg7: memref<8x2xf32, #tpu.memory_space<vmem>>) attributes {dimension_semantics = [], scalar_prefetch = 0 : i64, scratch_operands = 0 : i64, tpu.core_type = #tpu.core_type<tc>} {
    %c0 = arith.constant 0 : index
    %c0_0 = arith.constant 0 : index
    %0 = vector.load %arg0[%c0, %c0_0] : memref<8x4xf32, #tpu.memory_space<vmem>>, vector<8x4xf32>
    %c0_1 = arith.constant 0 : index
    %c0_2 = arith.constant 0 : index
    %1 = vector.load %arg1[%c0_1, %c0_2] : memref<4x32xf32, #tpu.memory_space<vmem>>, vector<4x32xf32>
    %c0_3 = arith.constant 0 : index
    %c0_4 = arith.constant 0 : index
    %2 = vector.load %arg2[%c0_3, %c0_4] : memref<1x32xf32, #tpu.memory_space<vmem>>, vector<1x32xf32>
    %cst = arith.constant dense<0.000000e+00> : vector<8x32xf32>
    %3 = tpu.matmul %0, %1, %cst {dimension_numbers = #tpu.dot_dimension_numbers<[1], [0], [0], [1], [0, 0, 1, 1], [], []>} : vector<8x4xf32>, vector<4x32xf32>, vector<8x32xf32> -> vector<8x32xf32>
    %4 = vector.broadcast %2 : vector<1x32xf32> to vector<8x32xf32>
    %5 = arith.addf %3, %4 : vector<8x32xf32>
    %6 = math.tanh %5 : vector<8x32xf32>
    %c0_5 = arith.constant 0 : index
    %c0_6 = arith.constant 0 : index
    %7 = vector.load %arg3[%c0_5, %c0_6] : memref<32x32xf32, #tpu.memory_space<vmem>>, vector<32x32xf32>
    %c0_7 = arith.constant 0 : index
    %c0_8 = arith.constant 0 : index
    %8 = vector.load %arg4[%c0_7, %c0_8] : memref<1x32xf32, #tpu.memory_space<vmem>>, vector<1x32xf32>
    %cst_9 = arith.constant dense<0.000000e+00> : vector<8x32xf32>
    %9 = tpu.matmul %6, %7, %cst_9 {dimension_numbers = #tpu.dot_dimension_numbers<[1], [0], [0], [1], [0, 0, 1, 1], [], []>} : vector<8x32xf32>, vector<32x32xf32>, vector<8x32xf32> -> vector<8x32xf32>
    %10 = vector.broadcast %8 : vector<1x32xf32> to vector<8x32xf32>
    %11 = arith.addf %9, %10 : vector<8x32xf32>
    %12 = math.tanh %11 : vector<8x32xf32>
    %c0_10 = arith.constant 0 : index
    %c0_11 = arith.constant 0 : index
    %13 = vector.load %arg5[%c0_10, %c0_11] : memref<32x2xf32, #tpu.memory_space<vmem>>, vector<32x2xf32>
    %c0_12 = arith.constant 0 : index
    %c0_13 = arith.constant 0 : index
    %14 = vector.load %arg6[%c0_12, %c0_13] : memref<1x2xf32, #tpu.memory_space<vmem>>, vector<1x2xf32>
    %cst_14 = arith.constant dense<0.000000e+00> : vector<8x2xf32>
    %15 = tpu.matmul %12, %13, %cst_14 {dimension_numbers = #tpu.dot_dimension_numbers<[1], [0], [0], [1], [0, 0, 1, 1], [], []>} : vector<8x32xf32>, vector<32x2xf32>, vector<8x2xf32> -> vector<8x2xf32>
    %16 = vector.broadcast %14 : vector<1x2xf32> to vector<8x2xf32>
    %17 = arith.addf %15, %16 : vector<8x2xf32>
    %c0_15 = arith.constant 0 : index
    %c0_16 = arith.constant 0 : index
    %18 = vector.load %arg7[%c0_15, %c0_16] : memref<8x2xf32, #tpu.memory_space<vmem>>, vector<8x2xf32>
    tpu.vector_store %arg7[%c0_15, %c0_16], %17 {strides = array<i32>} : memref<8x2xf32, #tpu.memory_space<vmem>>, vector<8x2xf32>,
    return
  }
}

</mosaic_0001>

<llo_original>
// kernel: tpu_custom_call.1
$region0: #{tpu_custom_call.1}
  #allocation0 [shape = 'u32[]', space=smem, size = 0x4, offset = 0x4, fixed_abs, tag = 'smem constant byte address 0x4 - core index']
  #allocation1 [shape = 'u32[144,128]{1,0:T(1,128)}', space=vmem, size = 0x12000, scoped, tag = 'internal scratch']
  %s0 = inlined_call_operand.vmem [shape: f32[8,4], index: 0, kind: input, shape index: {}]
  %s1 = inlined_call_operand.vmem [shape: f32[4,32], index: 1, kind: input, shape index: {}]
  %s2 = inlined_call_operand.vmem [shape: f32[1,32], index: 2, kind: input, shape index: {}]
  %s3 = inlined_call_operand.vmem [shape: f32[32,32], index: 3, kind: input, shape index: {}]
  %s4 = inlined_call_operand.vmem [shape: f32[1,32], index: 4, kind: input, shape index: {}]
  %s5 = inlined_call_operand.vmem [shape: f32[32,2], index: 5, kind: input, shape index: {}]
  %s6 = inlined_call_operand.vmem [shape: f32[1,2], index: 6, kind: input, shape index: {}]
  %s7 = inlined_call_operand.vmem [shape: f32[8,2], index: 7, kind: output, shape index: {}]
  %s8 = sld [smem:[#allocation0]]
  $region38: #{tpu_custom_call.1} parent=0
    _
  %s10 = ssub.s32 1, %s8
  %s11 = scalar_select 0, %s10, %s8
  // Predicated region
  $region2: #{tpu_custom_call.1} parent=0 // pred_check
    _
  $region3: #{tpu_custom_call.1} parent=0 // pred_check_branch
    %13 = sbr.rel (0) target = $region5
  $region4: #{tpu_custom_call.1} parent=0 // pred_region
    _
  $region5: #{tpu_custom_call.1} parent=0 // pred_fallthru
    _
  // Predicated region
  $region6: #{tpu_custom_call.1} parent=0 // pred_check
    _
  $region7: #{tpu_custom_call.1} parent=0 // pred_check_branch
    %15 = sbr.rel (0) target = $region9
  $region8: #{tpu_custom_call.1} parent=0 // pred_region
    _
  $region9: #{tpu_custom_call.1} parent=0 // pred_fallthru
    _
  // Predicated region
  $region10: #{tpu_custom_call.1} parent=0 // pred_check
    _
  $region11: #{tpu_custom_call.1} parent=0 // pred_check_branch
    %17 = sbr.rel (0) target = $region13
  $region12: #{tpu_custom_call.1} parent=0 // pred_region
    _
  $region13: #{tpu_custom_call.1} parent=0 // pred_fallthru
    _
  // Predicated region
  $region14: #{tpu_custom_call.1} parent=0 // pred_check
    _
  $region15: #{tpu_custom_call.1} parent=0 // pred_check_branch
    %19 = sbr.rel (0) target = $region17
  $region16: #{tpu_custom_call.1} parent=0 // pred_region
    _
  $region17: #{tpu_custom_call.1} parent=0 // pred_fallthru
    _
  // Predicated region
  $region18: #{tpu_custom_call.1} parent=0 // pred_check
    _
  $region19: #{tpu_custom_call.1} parent=0 // pred_check_branch
    %21 = sbr.rel (0) target = $region21
  $region20: #{tpu_custom_call.1} parent=0 // pred_region
    _
  $region21: #{tpu_custom_call.1} parent=0 // pred_fallthru
    _
  // Predicated region
  $region22: #{tpu_custom_call.1} parent=0 // pred_check
    _
  $region23: #{tpu_custom_call.1} parent=0 // pred_check_branch
    %23 = sbr.rel (0) target = $region25
  $region24: #{tpu_custom_call.1} parent=0 // pred_region
    _
  $region25: #{tpu_custom_call.1} parent=0 // pred_fallthru
    _
  // Predicated region
  $region26: #{tpu_custom_call.1} parent=0 // pred_check
    _
  $region27: #{tpu_custom_call.1} parent=0 // pred_check_branch
    %25 = sbr.rel (0) target = $region29
  $region28: #{tpu_custom_call.1} parent=0 // pred_region
    _
  $region29: #{tpu_custom_call.1} parent=0 // pred_fallthru
    _
  %v26 = vld [vmem:[%s0] sm:$0xff]
  %v27 = vld [vmem:[%s1] sm:$0xf]
  %v28 = vld [vmem:[%s2] sm:$0x1]
  %v30 = vlaneseq
  %v31 = vshrl.u32 %v30, 7
  %v32 = vsub.s32 0, %v31
  %v33 = vrot.slane %v28, %v32
  %vm35 = vcmask 31744
  %v37 = vsel %vm35, %v26, 0
  %vm39 = vcmask 1043456
  %v41 = vsel %vm39, %v27, 0
  %43 = vmatprep.subr.mxu0 0.0
  %44 = vmatpush1.msra.mxu0 %v41
  %45 = vmatprep.subr.mxu0 0.0
  %46 = vmatpush1.msra.mxu0 0.0
  %47 = vmatprep.subr.mxu0 0.0
  %48 = vmatpush1.msra.mxu0 0.0
  %49 = vmatprep.subr.mxu0 0.0
  %50 = vmatpush1.msra.mxu0 0.0
  %51 = vmatprep.subr.mxu0 0.0
  %52 = vmatpush1.msra.mxu0 0.0
  %53 = vmatprep.subr.mxu0 0.0
  %54 = vmatpush1.msra.mxu0 0.0
  %55 = vmatprep.subr.mxu0 0.0
  %56 = vmatpush1.msra.mxu0 0.0
  %57 = vmatprep.subr.mxu0 0.0
  %58 = vmatpush1.msra.mxu0 0.0
  %59 = vmatprep.subr.mxu0 0.0
  %60 = vmatpush1.msra.mxu0 0.0
  %61 = vmatprep.subr.mxu0 0.0
  %62 = vmatpush1.msra.mxu0 0.0
  %63 = vmatprep.subr.mxu0 0.0
  %64 = vmatpush1.msra.mxu0 0.0
  %65 = vmatprep.subr.mxu0 0.0
  %66 = vmatpush1.msra.mxu0 0.0
  %67 = vmatprep.subr.mxu0 0.0
  %68 = vmatpush1.msra.mxu0 0.0
  %69 = vmatprep.subr.mxu0 0.0
  %70 = vmatpush1.msra.mxu0 0.0
  %71 = vmatprep.subr.mxu0 0.0
  %72 = vmatpush1.msra.mxu0 0.0
  %73 = vmatprep.subr.mxu0 0.0
  %74 = vmatpush1.msra.mxu0 0.0
  %75 = vmatprep.subr.mxu0 0.0
  %76 = vmatpush1.msra.mxu0 0.0
  %77 = vmatprep.subr.mxu0 0.0
  %78 = vmatpush1.msra.mxu0 0.0
  %79 = vmatprep.subr.mxu0 0.0
  %80 = vmatpush1.msra.mxu0 0.0
  %81 = vmatprep.subr.mxu0 0.0
  %82 = vmatpush1.msra.mxu0 0.0
  %83 = vmatprep.subr.mxu0 0.0
  %84 = vmatpush1.msra.mxu0 0.0
  %85 = vmatprep.subr.mxu0 0.0
  %86 = vmatpush1.msra.mxu0 0.0
  %87 = vmatprep.subr.mxu0 0.0
  %88 = vmatpush1.msra.mxu0 0.0
  %89 = vmatprep.subr.mxu0 0.0
  %90 = vmatpush1.msra.mxu0 0.0
  %91 = vmatprep.subr.mxu0 0.0
  %92 = vmatpush1.msra.mxu0 0.0
  %93 = vmatprep.subr.mxu0 0.0
  %94 = vmatpush1.msra.mxu0 0.0
  %95 = vmatprep.subr.mxu0 0.0
  %96 = vmatpush1.msra.mxu0 0.0
  %97 = vmatprep.subr.mxu0 0.0
  %98 = vmatpush1.msra.mxu0 0.0
  %99 = vmatprep.subr.mxu0 0.0
  %100 = vmatpush1.msra.mxu0 0.0
  %101 = vmatprep.subr.mxu0 0.0
  %102 = vmatpush1.msra.mxu0 0.0
  %103 = vmatprep.subr.mxu0 0.0
  %104 = vmatpush1.msra.mxu0 0.0
  %105 = vmatprep.subr.mxu0 0.0
  %106 = vmatpush1.msra.mxu0 0.0
  %107 = vmatprep.mubr.f32.mxu0 0.0
  %108 = vmatmul.mubr.f32.gmra.mrb[0].mxu0 %v37
  %v109 = vpop.f32.mrb[0].mxu0
  %v110 = vadd.f32 %v33, %v109
  %v111 = vpop.f32.mrb[0].mxu0
  %112 = vdwg.mxu0
  %v113 = vtanh.pop %v110
  %v114 = vld [vmem:[%s3] sm:$0xff]
  %v115 = vld [vmem:[%s3 + $0x8] sm:$0xff]
  %v116 = vld [vmem:[%s3 + $0x10] sm:$0xff]
  %v117 = vld [vmem:[%s3 + $0x18] sm:$0xff]
  %v118 = vld [vmem:[%s4] sm:$0x1]
  %v120 = vlaneseq
  %v121 = vshrl.u32 %v120, 7
  %v122 = vsub.s32 0, %v121
  %v123 = vrot.slane %v118, %v122
  %vm125 = vcmask 261120
  %v127 = vsel %vm125, %v113, 0
  %129 = vmatprep.subr.mxu0 0.0
  %130 = vmatpush1.msra.mxu0 %v114
  %131 = vmatprep.subr.mxu0 0.0
  %132 = vmatpush1.msra.mxu0 %v115
  %133 = vmatprep.subr.mxu0 0.0
  %134 = vmatpush1.msra.mxu0 %v116
  %135 = vmatprep.subr.mxu0 0.0
  %136 = vmatpush1.msra.mxu0 %v117
  %137 = vmatprep.subr.mxu0 0.0
  %138 = vmatpush1.msra.mxu0 0.0
  %139 = vmatprep.subr.mxu0 0.0
  %140 = vmatpush1.msra.mxu0 0.0
  %141 = vmatprep.subr.mxu0 0.0
  %142 = vmatpush1.msra.mxu0 0.0
  %143 = vmatprep.subr.mxu0 0.0
  %144 = vmatpush1.msra.mxu0 0.0
  %145 = vmatprep.subr.mxu0 0.0
  %146 = vmatpush1.msra.mxu0 0.0
  %147 = vmatprep.subr.mxu0 0.0
  %148 = vmatpush1.msra.mxu0 0.0
  %149 = vmatprep.subr.mxu0 0.0
  %150 = vmatpush1.msra.mxu0 0.0
  %151 = vmatprep.subr.mxu0 0.0
  %152 = vmatpush1.msra.mxu0 0.0
  %153 = vmatprep.subr.mxu0 0.0
  %154 = vmatpush1.msra.mxu0 0.0
  %155 = vmatprep.subr.mxu0 0.0
  %156 = vmatpush1.msra.mxu0 0.0
  %157 = vmatprep.subr.mxu0 0.0
  %158 = vmatpush1.msra.mxu0 0.0
  %159 = vmatprep.subr.mxu0 0.0
  %160 = vmatpush1.msra.mxu0 0.0
  %161 = vmatprep.subr.mxu0 0.0
  %162 = vmatpush1.msra.mxu0 0.0
  %163 = vmatprep.subr.mxu0 0.0
  %164 = vmatpush1.msra.mxu0 0.0
  %165 = vmatprep.subr.mxu0 0.0
  %166 = vmatpush1.msra.mxu0 0.0
  %167 = vmatprep.subr.mxu0 0.0
  %168 = vmatpush1.msra.mxu0 0.0
  %169 = vmatprep.subr.mxu0 0.0
  %170 = vmatpush1.msra.mxu0 0.0
  %171 = vmatprep.subr.mxu0 0.0
  %172 = vmatpush1.msra.mxu0 0.0
  %173 = vmatprep.subr.mxu0 0.0
  %174 = vmatpush1.msra.mxu0 0.0
  %175 = vmatprep.subr.mxu0 0.0
  %176 = vmatpush1.msra.mxu0 0.0
  %177 = vmatprep.subr.mxu0 0.0
  %178 = vmatpush1.msra.mxu0 0.0
  %179 = vmatprep.subr.mxu0 0.0
  %180 = vmatpush1.msra.mxu0 0.0
  %181 = vmatprep.subr.mxu0 0.0
  %182 = vmatpush1.msra.mxu0 0.0
  %183 = vmatprep.subr.mxu0 0.0
  %184 = vmatpush1.msra.mxu0 0.0
  %185 = vmatprep.subr.mxu0 0.0
  %186 = vmatpush1.msra.mxu0 0.0
  %187 = vmatprep.subr.mxu0 0.0
  %188 = vmatpush1.msra.mxu0 0.0
  %189 = vmatprep.subr.mxu0 0.0
  %190 = vmatpush1.msra.mxu0 0.0
  %191 = vmatprep.subr.mxu0 0.0
  %192 = vmatpush1.msra.mxu0 0.0
  %193 = vmatprep.mubr.f32.mxu0 0.0
  %194 = vmatmul.mubr.f32.gmra.mrb[0].mxu0 %v127
  %v195 = vpop.f32.mrb[0].mxu0
  %v196 = vadd.f32 %v123, %v195
  %v197 = vpop.f32.mrb[0].mxu0
  %198 = vdwg.mxu0
  %v199 = vtanh.pop %v196
  %v200 = vld [vmem:[%s5] sm:$0xff]
  %v201 = vld [vmem:[%s5 + $0x8] sm:$0xff]
  %v202 = vld [vmem:[%s5 + $0x10] sm:$0xff]
  %v203 = vld [vmem:[%s5 + $0x18] sm:$0xff]
  %v204 = vld [vmem:[%s6] sm:$0x1]
  %v206 = vlaneseq
  %v207 = vshrl.u32 %v206, 7
  %v208 = vsub.s32 0, %v207
  %v209 = vrot.slane %v204, %v208
  %v212 = vsel %vm125, %v199, 0
  %214 = vmatprep.subr.mxu0 0.0
  %215 = vmatpush1.msra.mxu0 %v200
  %216 = vmatprep.subr.mxu0 0.0
  %217 = vmatpush1.msra.mxu0 %v201
  %218 = vmatprep.subr.mxu0 0.0
  %219 = vmatpush1.msra.mxu0 %v202
  %220 = vmatprep.subr.mxu0 0.0
  %221 = vmatpush1.msra.mxu0 %v203
  %222 = vmatprep.subr.mxu0 0.0
  %223 = vmatpush1.msra.mxu0 0.0
  %224 = vmatprep.subr.mxu0 0.0
  %225 = vmatpush1.msra.mxu0 0.0
  %226 = vmatprep.subr.mxu0 0.0
  %227 = vmatpush1.msra.mxu0 0.0
  %228 = vmatprep.subr.mxu0 0.0
  %229 = vmatpush1.msra.mxu0 0.0
  %230 = vmatprep.subr.mxu0 0.0
  %231 = vmatpush1.msra.mxu0 0.0
  %232 = vmatprep.subr.mxu0 0.0
  %233 = vmatpush1.msra.mxu0 0.0
  %234 = vmatprep.subr.mxu0 0.0
  %235 = vmatpush1.msra.mxu0 0.0
  %236 = vmatprep.subr.mxu0 0.0
  %237 = vmatpush1.msra.mxu0 0.0
  %238 = vmatprep.subr.mxu0 0.0
  %239 = vmatpush1.msra.mxu0 0.0
  %240 = vmatprep.subr.mxu0 0.0
  %241 = vmatpush1.msra.mxu0 0.0
  %242 = vmatprep.subr.mxu0 0.0
  %243 = vmatpush1.msra.mxu0 0.0
  %244 = vmatprep.subr.mxu0 0.0
  %245 = vmatpush1.msra.mxu0 0.0
  %246 = vmatprep.subr.mxu0 0.0
  %247 = vmatpush1.msra.mxu0 0.0
  %248 = vmatprep.subr.mxu0 0.0
  %249 = vmatpush1.msra.mxu0 0.0
  %250 = vmatprep.subr.mxu0 0.0
  %251 = vmatpush1.msra.mxu0 0.0
  %252 = vmatprep.subr.mxu0 0.0
  %253 = vmatpush1.msra.mxu0 0.0
  %254 = vmatprep.subr.mxu0 0.0
  %255 = vmatpush1.msra.mxu0 0.0
  %256 = vmatprep.subr.mxu0 0.0
  %257 = vmatpush1.msra.mxu0 0.0
  %258 = vmatprep.subr.mxu0 0.0
  %259 = vmatpush1.msra.mxu0 0.0
  %260 = vmatprep.subr.mxu0 0.0
  %261 = vmatpush1.msra.mxu0 0.0
  %262 = vmatprep.subr.mxu0 0.0
  %263 = vmatpush1.msra.mxu0 0.0
  %264 = vmatprep.subr.mxu0 0.0
  %265 = vmatpush1.msra.mxu0 0.0
  %266 = vmatprep.subr.mxu0 0.0
  %267 = vmatpush1.msra.mxu0 0.0
  %268 = vmatprep.subr.mxu0 0.0
  %269 = vmatpush1.msra.mxu0 0.0
  %270 = vmatprep.subr.mxu0 0.0
  %271 = vmatpush1.msra.mxu0 0.0
  %272 = vmatprep.subr.mxu0 0.0
  %273 = vmatpush1.msra.mxu0 0.0
  %274 = vmatprep.subr.mxu0 0.0
  %275 = vmatpush1.msra.mxu0 0.0
  %276 = vmatprep.subr.mxu0 0.0
  %277 = vmatpush1.msra.mxu0 0.0
  %278 = vmatprep.mubr.f32.mxu0 0.0
  %279 = vmatmul.mubr.f32.gmra.mrb[0].mxu0 %v212
  %v280 = vpop.f32.mrb[0].mxu0
  %v281 = vadd.f32 %v209, %v280
  %v282 = vpop.f32.mrb[0].mxu0
  %283 = vdwg.mxu0
  %vm284 = vcmask 15360
  %285 = vst.msk [vmem:[%s7] sm:$0xff] %vm284, %v281
  // Predicated region
  $region30: #{tpu_custom_call.1} parent=0 // pred_check
    _
  $region31: #{tpu_custom_call.1} parent=0 // pred_check_branch
    %287 = sbr.rel (0) target = $region33
  $region32: #{tpu_custom_call.1} parent=0 // pred_region
    _
  $region33: #{tpu_custom_call.1} parent=0 // pred_fallthru
    _
  // Predicated region
  $region34: #{tpu_custom_call.1} parent=0 // pred_check
    _
  $region35: #{tpu_custom_call.1} parent=0 // pred_check_branch
    %289 = sbr.rel (0) target = $region37
  $region36: #{tpu_custom_call.1} parent=0 // pred_region
    _
  $region37: #{tpu_custom_call.1} parent=0 // pred_fallthru
    _

</llo_original>
